<compile_context>
chip_gen: v7x
topology: tpu7x:2x2x1
jax: 0.10.0
libtpu: 0.0.40
codegen_flags: <defaults>
</compile_context>

<pallas_src>
import math
import functools

import jax
import jax.numpy as jnp
from jax.experimental import pallas as pl
from jax.experimental.pallas import tpu as pltpu


def _round_up(a, b):
    return (a + b - 1) // b * b


def _leaky(out, neg_slope, act_scale):
    # leaky_relu(x, s) == max(x, s*x) for 0 < s < 1, then * sqrt(2).
    return jnp.maximum(out, neg_slope * out) * act_scale


def _equal_linear_kernel_single_k(apply_act, neg_slope, act_scale,
                                  x_ref, w_ref, b_ref, o_ref):
    # Whole reduction fits in one K tile: single MXU pass + fused epilogue.
    out = jnp.dot(x_ref[...], w_ref[...], preferred_element_type=jnp.float32)
    out = out + b_ref[...]
    if apply_act:
        out = _leaky(out, neg_slope, act_scale)
    o_ref[...] = out.astype(o_ref.dtype)


def _equal_linear_kernel_kloop(apply_act, neg_slope, act_scale,
                               x_ref, w_ref, b_ref, o_ref, acc_ref):
    # Initialize the resident accumulator with the (broadcast) bias on the
    # first K step; accumulate MXU partials; fused activation on the last step.
    @pl.when(pl.program_id(2) == 0)
    def _():
        acc_ref[...] = jnp.broadcast_to(b_ref[...], acc_ref.shape)

    acc_ref[...] += jnp.dot(x_ref[...], w_ref[...],
                            preferred_element_type=jnp.float32)

    @pl.when(pl.program_id(2) == pl.num_programs(2) - 1)
    def _():
        out = acc_ref[...]
        if apply_act:
            out = _leaky(out, neg_slope, act_scale)
        o_ref[...] = out.astype(o_ref.dtype)


def equal_linear_forward(x, weight, bias=None, *, lr_mul=1.0, activation=None,
                         compute_dtype=jnp.float32):
    """EqualLinear forward.

    x: (..., in_dim); weight: (out_dim, in_dim); bias: (out_dim,) or None.
    """
    orig_shape = x.shape
    K = orig_shape[-1]
    N = weight.shape[0]
    M = int(math.prod(orig_shape[:-1])) if len(orig_shape) > 1 else 1
    x2 = x.reshape(M, K)

    # ---- fold EqualLinear scaling into the operands (off the hot path) ----
    scale = (1.0 / math.sqrt(K)) * lr_mul
    w_kn = (weight.astype(jnp.float32) * scale).T                  # (K, N)
    if bias is None:
        b = jnp.zeros((N,), jnp.float32)
    else:
        b = bias.astype(jnp.float32) * lr_mul
    b2 = b.reshape(1, N)

    # TODO(synk): for >2-D inputs with an activation, PyTorch's
    # fused_leaky_relu broadcasts the bias over dim 1; here the bias is applied
    # over the output-feature (last) dim, matching the 2-D mapping-network use.

    # ---- tile sizes (VMEM-safe on v5e/v6e/v7x, lane/sublane aligned) ----
    tm = min(256, _round_up(M, 8))
    tn = min(256, _round_up(N, 128))
    tk = min(512, _round_up(K, 128))
    Mp, Np, Kp = _round_up(M, tm), _round_up(N, tn), _round_up(K, tk)

    x_p = jnp.pad(x2.astype(compute_dtype), ((0, Mp - M), (0, Kp - K)))
    w_p = jnp.pad(w_kn.astype(compute_dtype), ((0, Kp - K), (0, Np - N)))
    b_p = jnp.pad(b2, ((0, 0), (0, Np - N)))

    apply_act = activation is not None
    itemsize = jnp.dtype(compute_dtype).itemsize
    cost = pl.CostEstimate(
        flops=2 * Mp * Np * Kp,
        transcendentals=0,
        bytes_accessed=(Mp * Kp * itemsize + Kp * Np * itemsize
                        + Np * 4 + Mp * Np * 4))

    if Kp == tk:
        # --- single-K fast path: no accumulator scratch, no pl.when gates ---
        kernel = functools.partial(_equal_linear_kernel_single_k,
                                   apply_act, 0.2, math.sqrt(2.0))
        out_p = pl.pallas_call(
            kernel,
            out_shape=jax.ShapeDtypeStruct((Mp, Np), x.dtype),
            grid_spec=pltpu.PrefetchScalarGridSpec(
                num_scalar_prefetch=0,
                grid=(Mp // tm, Np // tn),
                in_specs=[
                    pl.BlockSpec((tm, tk), lambda i, j: (i, 0)),   # x tile
                    pl.BlockSpec((tk, tn), lambda i, j: (0, j)),   # (K,N) weight
                    pl.BlockSpec((1, tn), lambda i, j: (0, j)),    # bias tile
                ],
                out_specs=pl.BlockSpec((tm, tn), lambda i, j: (i, j)),
            ),
            compiler_params=pltpu.CompilerParams(
                dimension_semantics=("parallel", "parallel")),
            cost_estimate=cost,
        )(x_p, w_p, b_p)
    else:
        # --- K-loop path with resident fp32 accumulator ---
        kernel = functools.partial(_equal_linear_kernel_kloop,
                                   apply_act, 0.2, math.sqrt(2.0))
        out_p = pl.pallas_call(
            kernel,
            out_shape=jax.ShapeDtypeStruct((Mp, Np), x.dtype),
            grid_spec=pltpu.PrefetchScalarGridSpec(
                num_scalar_prefetch=0,
                grid=(Mp // tm, Np // tn, Kp // tk),
                in_specs=[
                    pl.BlockSpec((tm, tk), lambda i, j, k: (i, k)),   # x tile
                    pl.BlockSpec((tk, tn), lambda i, j, k: (k, j)),   # (K,N) weight
                    pl.BlockSpec((1, tn), lambda i, j, k: (0, j)),    # bias tile
                ],
                out_specs=pl.BlockSpec((tm, tn), lambda i, j, k: (i, j)),
                scratch_shapes=[pltpu.VMEM((tm, tn), jnp.float32)],
            ),
            compiler_params=pltpu.CompilerParams(
                dimension_semantics=("parallel", "parallel", "arbitrary")),
            cost_estimate=cost,
        )(x_p, w_p, b_p)

    out = out_p[:M, :N]
    return out.reshape(*orig_shape[:-1], N)


def equal_linear_reference(x, weight, bias=None, *, lr_mul=1.0, activation=None):
    """Pure-JAX reference mirroring PyTorch EqualLinear (2-D x for activation)."""
    scale = (1.0 / math.sqrt(weight.shape[1])) * lr_mul
    out = x @ (weight * scale).T
    b = (bias * lr_mul) if bias is not None else 0.0
    out = out + b
    if activation is not None:
        out = jnp.where(out >= 0.0, out, 0.2 * out) * math.sqrt(2.0)
    return out


if __name__ == "__main__":
    key = jax.random.PRNGKey(0)
    kw, kb, ka, kx1, kx2, kw2, kb2, kx3 = jax.random.split(key, 8)

    in_dim, out_dim = 32, 64

    weight = jax.random.normal(kw, (out_dim, in_dim), dtype=jnp.float32)
    bias_a = jax.random.normal(kb, (out_dim,), dtype=jnp.float32)
    bias_b = jax.random.normal(ka, (out_dim,), dtype=jnp.float32)

    # Case A: mapping-network style call (2-D input, fused leaky-relu).
    x_a = jax.random.normal(kx1, (8, in_dim), dtype=jnp.float32)
    out_a = jax.block_until_ready(
        equal_linear_forward(x_a, weight, bias_a, activation="fused_lrelu"))
    ref_a = equal_linear_reference(x_a, weight, bias_a, activation="fused_lrelu")
    assert out_a.shape == (8, out_dim)
    assert jnp.allclose(out_a, ref_a, atol=1e-2, rtol=1e-2), (
        float(jnp.max(jnp.abs(out_a - ref_a))))

    # Case B: plain linear (3-D input, activation=None).
    x_b = jax.random.normal(kx2, (2, 8, in_dim), dtype=jnp.float32)
    out_b = jax.block_until_ready(
        equal_linear_forward(x_b, weight, bias_b, activation=None))
    ref_b = equal_linear_reference(x_b, weight, bias_b, activation=None)
    assert out_b.shape == (2, 8, out_dim)
    assert jnp.allclose(out_b, ref_b, atol=1e-2, rtol=1e-2), (
        float(jnp.max(jnp.abs(out_b - ref_b))))

    # Case C: larger in_dim (exercises the K-loop accumulator path), lr_mul=0.01.
    in_dim_c = 640
    weight_c = jax.random.normal(kw2, (out_dim, in_dim_c), dtype=jnp.float32)
    bias_c = jax.random.normal(kb2, (out_dim,), dtype=jnp.float32)
    x_c = jax.random.normal(kx3, (8, in_dim_c), dtype=jnp.float32)
    out_c = jax.block_until_ready(
        equal_linear_forward(x_c, weight_c, bias_c, lr_mul=0.01,
                             activation="fused_lrelu"))
    ref_c = equal_linear_reference(x_c, weight_c, bias_c, lr_mul=0.01,
                                   activation="fused_lrelu")
    assert out_c.shape == (8, out_dim)
    assert jnp.allclose(out_c, ref_c, atol=1e-2, rtol=1e-2), (
        float(jnp.max(jnp.abs(out_c - ref_c))))

    print("KERNEL_OK")
</pallas_src>

<mosaic_0001>
module attributes {stable_mosaic.version = 11 : i64} {
  func.func @_equal_linear_kernel_single_k(%arg0: i32, %arg1: i32, %arg2: memref<8x128xf32, #tpu.memory_space<vmem>>, %arg3: memref<128x128xf32, #tpu.memory_space<vmem>>, %arg4: memref<1x128xf32, #tpu.memory_space<vmem>>, %arg5: memref<8x128xf32, #tpu.memory_space<vmem>>) attributes {dimension_semantics = [#tpu.dimension_semantics<parallel>, #tpu.dimension_semantics<parallel>], iteration_bounds = array<i64: 1, 1>, scalar_prefetch = 0 : i64, scratch_operands = 0 : i64, tpu.core_type = #tpu.core_type<tc>, window_params = [{transform_indices = @transform_0, window_bounds = array<i64: 8, 128>}, {transform_indices = @transform_1, window_bounds = array<i64: 128, 128>}, {transform_indices = @transform_2, window_bounds = array<i64: 1, 128>}, {transform_indices = @transform_3, window_bounds = array<i64: 8, 128>}]} {
    %c0 = arith.constant 0 : index
    %c0_0 = arith.constant 0 : index
    %0 = vector.load %arg2[%c0, %c0_0] : memref<8x128xf32, #tpu.memory_space<vmem>>, vector<8x128xf32>
    %c0_1 = arith.constant 0 : index
    %c0_2 = arith.constant 0 : index
    %1 = vector.load %arg3[%c0_1, %c0_2] : memref<128x128xf32, #tpu.memory_space<vmem>>, vector<128x128xf32>
    %cst = arith.constant dense<0.000000e+00> : vector<8x128xf32>
    %2 = tpu.matmul %0, %1, %cst {dimension_numbers = #tpu.dot_dimension_numbers<[1], [0], [0], [1], [0, 0, 1, 1], [], []>} : vector<8x128xf32>, vector<128x128xf32>, vector<8x128xf32> -> vector<8x128xf32>
    %c0_3 = arith.constant 0 : index
    %c0_4 = arith.constant 0 : index
    %3 = vector.load %arg4[%c0_3, %c0_4] : memref<1x128xf32, #tpu.memory_space<vmem>>, vector<1x128xf32>
    %4 = vector.broadcast %3 : vector<1x128xf32> to vector<8x128xf32>
    %5 = arith.addf %2, %4 : vector<8x128xf32>
    %cst_5 = arith.constant 2.000000e-01 : f32
    %6 = vector.broadcast %cst_5 : f32 to vector<8x128xf32>
    %7 = arith.mulf %6, %5 : vector<8x128xf32>
    %8 = arith.maximumf %5, %7 : vector<8x128xf32>
    %cst_6 = arith.constant 1.41421354 : f32
    %9 = vector.broadcast %cst_6 : f32 to vector<8x128xf32>
    %10 = arith.mulf %8, %9 : vector<8x128xf32>
    %c0_7 = arith.constant 0 : index
    %c0_8 = arith.constant 0 : index
    %11 = vector.load %arg5[%c0_7, %c0_8] : memref<8x128xf32, #tpu.memory_space<vmem>>, vector<8x128xf32>
    tpu.vector_store %arg5[%c0_7, %c0_8], %10 {strides = array<i32>} : memref<8x128xf32, #tpu.memory_space<vmem>>, vector<8x128xf32>,
    return
  }
  func.func @transform_0(%arg0: i32, %arg1: i32) -> (i32, i32) {
    %c0_i32 = arith.constant 0 : i32
    %c0_i32_0 = arith.constant 0 : i32
    return %arg0, %c0_i32 : i32, i32
  }
  func.func @transform_1(%arg0: i32, %arg1: i32) -> (i32, i32) {
    %c0_i32 = arith.constant 0 : i32
    %c0_i32_0 = arith.constant 0 : i32
    return %c0_i32, %arg1 : i32, i32
  }
  func.func @transform_2(%arg0: i32, %arg1: i32) -> (i32, i32) {
    %c0_i32 = arith.constant 0 : i32
    %c0_i32_0 = arith.constant 0 : i32
    return %c0_i32, %arg1 : i32, i32
  }
  func.func @transform_3(%arg0: i32, %arg1: i32) -> (i32, i32) {
    %c0_i32 = arith.constant 0 : i32
    return %arg0, %arg1 : i32, i32
  }
}

</mosaic_0001>

<llo_original>
// kernel: tpu_custom_call.1
$region0: #{tpu_custom_call.1}
  #allocation0 [shape = 'u32[]', space=smem, size = 0x4, offset = 0x4, fixed_abs, tag = 'smem constant byte address 0x4 - core index']
  #allocation1 [shape = 'u32[144,128]{1,0:T(1,128)}', space=vmem, size = 0x12000, scoped, tag = 'internal scratch']
  %s0 = inlined_call_operand.hbm [shape: f32[8,128], index: 0, kind: input, shape index: {}]
  %s1 = inlined_call_operand.hbm [shape: f32[128,128], index: 1, kind: input, shape index: {}]
  %s2 = inlined_call_operand.vmem [shape: f32[1,128], index: 2, kind: input, shape index: {}]
  %s3 = inlined_call_operand.hbm [shape: f32[8,128], index: 3, kind: output, shape index: {}]
  %s4 = sld [smem:[#allocation0]]
  $region30: #{tpu_custom_call.1} parent=0
    _
  %s6 = ssub.s32 1, %s4
  %s7 = scalar_select 0, %s6, %s4
  $region1: #{tpu_custom_call.1} parent=0
    #allocation2 [shape = 'u8[4096]{0}', space=vmem, size = 0x1000, scoped, tag = 'input window, operand 0, single buffered']
    #allocation3 [shape = 's32[1]{0}', space=sflag, size = 0x4, scoped, tag = 'scoped memory for tpu_custom_call.1']
    #allocation4 [shape = 's32[1]{0}', space=sflag, size = 0x4, scoped, tag = 'scoped memory for tpu_custom_call.1']
    #allocation5 [shape = 'u8[65536]{0}', space=vmem, size = 0x10000, scoped, tag = 'input window, operand 1, single buffered']
    #allocation6 [shape = 's32[1]{0}', space=sflag, size = 0x4, scoped, tag = 'scoped memory for tpu_custom_call.1']
    #allocation7 [shape = 'u8[4096]{0}', space=vmem, size = 0x1000, scoped, tag = 'output window, operand 0, single buffered']
    %8 = vsyncpa [#allocation3], 0
    %9 = vsyncpa [#allocation6], 0
    %10 = vsyncpa [#allocation4], 0
    // Predicated region
    $region2: #{tpu_custom_call.1} parent=1 // pred_check
      _
    $region3: #{tpu_custom_call.1} parent=1 // pred_check_branch
      %12 = sbr.rel (0) target = $region5
    $region4: #{tpu_custom_call.1} parent=1 // pred_region
      %s14 = ssub.s32 128, 128
      %15 = vsyncadd [#allocation3], %s14
      %s17 = sshll.u32 [#allocation2], 4
      %s18 = int_to_ptr.vmem [resolvable:$true] %s17
      %20 = dma.hbm_to_vmem [thread:$0]  %s0, 128, %s18, [#allocation3]
    $region5: #{tpu_custom_call.1} parent=1 // pred_fallthru
      _
    // Predicated region
    $region6: #{tpu_custom_call.1} parent=1 // pred_check
      _
    $region7: #{tpu_custom_call.1} parent=1 // pred_check_branch
      %22 = sbr.rel (0) target = $region9
    $region8: #{tpu_custom_call.1} parent=1 // pred_region
      %s24 = ssub.s32 2048, 2048
      %25 = vsyncadd [#allocation6], %s24
      %s26 = sshll.u32 [#allocation5], 4
      %s27 = int_to_ptr.vmem [resolvable:$true] %s26
      %32 = dma.hbm_to_vmem [thread:$0]  %s1, 2048, %s27, [#allocation6], 128, 128, 8
    $region9: #{tpu_custom_call.1} parent=1 // pred_fallthru
      _
    // Predicated region
    $region10: #{tpu_custom_call.1} parent=1 // pred_check
      _
    $region11: #{tpu_custom_call.1} parent=1 // pred_check_branch
      %34 = sbr.rel (0) target = $region13
    $region12: #{tpu_custom_call.1} parent=1 // pred_region
      _
    $region13: #{tpu_custom_call.1} parent=1 // pred_fallthru
      _
    // Predicated region
    $region14: #{tpu_custom_call.1} parent=1 // pred_check
      _
    $region15: #{tpu_custom_call.1} parent=1 // pred_check_branch
      %36 = sbr.rel (0) target = $region17
    $region16: #{tpu_custom_call.1} parent=1 // pred_region
      %37 = dma.done [#allocation3], 128
    $region17: #{tpu_custom_call.1} parent=1 // pred_fallthru
      _
    // Predicated region
    $region18: #{tpu_custom_call.1} parent=1 // pred_check
      _
    $region19: #{tpu_custom_call.1} parent=1 // pred_check_branch
      %39 = sbr.rel (0) target = $region21
    $region20: #{tpu_custom_call.1} parent=1 // pred_region
      %40 = dma.done [#allocation6], 2048
    $region21: #{tpu_custom_call.1} parent=1 // pred_fallthru
      _
    %v41 = vld [vmem:[#allocation2] sm:$0xff]
    %v42 = vld [vmem:[#allocation5] sm:$0xff]
    %v43 = vld [vmem:[#allocation5 + $0x8] sm:$0xff]
    %v44 = vld [vmem:[#allocation5 + $0x10] sm:$0xff]
    %v45 = vld [vmem:[#allocation5 + $0x18] sm:$0xff]
    %v46 = vld [vmem:[#allocation5 + $0x20] sm:$0xff]
    %v47 = vld [vmem:[#allocation5 + $0x28] sm:$0xff]
    %v48 = vld [vmem:[#allocation5 + $0x30] sm:$0xff]
    %v49 = vld [vmem:[#allocation5 + $0x38] sm:$0xff]
    %v50 = vld [vmem:[#allocation5 + $0x40] sm:$0xff]
    %v51 = vld [vmem:[#allocation5 + $0x48] sm:$0xff]
    %v52 = vld [vmem:[#allocation5 + $0x50] sm:$0xff]
    %v53 = vld [vmem:[#allocation5 + $0x58] sm:$0xff]
    %v54 = vld [vmem:[#allocation5 + $0x60] sm:$0xff]
    %v55 = vld [vmem:[#allocation5 + $0x68] sm:$0xff]
    %v56 = vld [vmem:[#allocation5 + $0x70] sm:$0xff]
    %v57 = vld [vmem:[#allocation5 + $0x78] sm:$0xff]
    %v58 = vld [vmem:[%s2] sm:$0x1]
    %v60 = vlaneseq
    %v61 = vshrl.u32 %v60, 7
    %v62 = vsub.s32 0, %v61
    %v63 = vrot.slane %v58, %v62
    %65 = vmatprep.subr.mxu0 0.0
    %66 = vmatpush1.msra.mxu0 %v42
    %67 = vmatprep.subr.mxu0 0.0
    %68 = vmatpush1.msra.mxu0 %v43
    %69 = vmatprep.subr.mxu0 0.0
    %70 = vmatpush1.msra.mxu0 %v44
    %71 = vmatprep.subr.mxu0 0.0
    %72 = vmatpush1.msra.mxu0 %v45
    %73 = vmatprep.subr.mxu0 0.0
    %74 = vmatpush1.msra.mxu0 %v46
    %75 = vmatprep.subr.mxu0 0.0
    %76 = vmatpush1.msra.mxu0 %v47
    %77 = vmatprep.subr.mxu0 0.0
    %78 = vmatpush1.msra.mxu0 %v48
    %79 = vmatprep.subr.mxu0 0.0
    %80 = vmatpush1.msra.mxu0 %v49
    %81 = vmatprep.subr.mxu0 0.0
    %82 = vmatpush1.msra.mxu0 %v50
    %83 = vmatprep.subr.mxu0 0.0
    %84 = vmatpush1.msra.mxu0 %v51
    %85 = vmatprep.subr.mxu0 0.0
    %86 = vmatpush1.msra.mxu0 %v52
    %87 = vmatprep.subr.mxu0 0.0
    %88 = vmatpush1.msra.mxu0 %v53
    %89 = vmatprep.subr.mxu0 0.0
    %90 = vmatpush1.msra.mxu0 %v54
    %91 = vmatprep.subr.mxu0 0.0
    %92 = vmatpush1.msra.mxu0 %v55
    %93 = vmatprep.subr.mxu0 0.0
    %94 = vmatpush1.msra.mxu0 %v56
    %95 = vmatprep.subr.mxu0 0.0
    %96 = vmatpush1.msra.mxu0 %v57
    %97 = vmatprep.subr.mxu0 0.0
    %98 = vmatpush1.msra.mxu0 0.0
    %99 = vmatprep.subr.mxu0 0.0
    %100 = vmatpush1.msra.mxu0 0.0
    %101 = vmatprep.subr.mxu0 0.0
    %102 = vmatpush1.msra.mxu0 0.0
    %103 = vmatprep.subr.mxu0 0.0
    %104 = vmatpush1.msra.mxu0 0.0
    %105 = vmatprep.subr.mxu0 0.0
    %106 = vmatpush1.msra.mxu0 0.0
    %107 = vmatprep.subr.mxu0 0.0
    %108 = vmatpush1.msra.mxu0 0.0
    %109 = vmatprep.subr.mxu0 0.0
    %110 = vmatpush1.msra.mxu0 0.0
    %111 = vmatprep.subr.mxu0 0.0
    %112 = vmatpush1.msra.mxu0 0.0
    %113 = vmatprep.subr.mxu0 0.0
    %114 = vmatpush1.msra.mxu0 0.0
    %115 = vmatprep.subr.mxu0 0.0
    %116 = vmatpush1.msra.mxu0 0.0
    %117 = vmatprep.subr.mxu0 0.0
    %118 = vmatpush1.msra.mxu0 0.0
    %119 = vmatprep.subr.mxu0 0.0
    %120 = vmatpush1.msra.mxu0 0.0
    %121 = vmatprep.subr.mxu0 0.0
    %122 = vmatpush1.msra.mxu0 0.0
    %123 = vmatprep.subr.mxu0 0.0
    %124 = vmatpush1.msra.mxu0 0.0
    %125 = vmatprep.subr.mxu0 0.0
    %126 = vmatpush1.msra.mxu0 0.0
    %127 = vmatprep.subr.mxu0 0.0
    %128 = vmatpush1.msra.mxu0 0.0
    %129 = vmatprep.mubr.f32.mxu0 0.0
    %130 = vmatmul.mubr.f32.gmra.mrb[0].mxu0 %v41
    %v131 = vpop.f32.mrb[0].mxu0
    %v132 = vadd.f32 %v63, %v131
    %v133 = vpop.f32.mrb[0].mxu0
    %134 = vdwg.mxu0
    %v135 = vmul.f32 %v132, 0.2
    %v136 = vmax.f32 %v132, %v135
    %v137 = vmul.f32 %v136, 1.4142135
    %138 = vst [vmem:[#allocation7] sm:$0xff] %v137
    // Predicated region
    $region22: #{tpu_custom_call.1} parent=1 // pred_check
      _
    $region23: #{tpu_custom_call.1} parent=1 // pred_check_branch
      %140 = sbr.rel (0) target = $region25
    $region24: #{tpu_custom_call.1} parent=1 // pred_region
      %s142 = ssub.s32 128, 128
      %143 = vsyncadd [#allocation4], %s142
      %s145 = sshll.u32 [#allocation7], 4
      %s146 = int_to_ptr.vmem [resolvable:$true] %s145
      %148 = dma.vmem_to_hbm [thread:$0]  %s146, 128, %s3, [#allocation4]
    $region25: #{tpu_custom_call.1} parent=1 // pred_fallthru
      _
    // Predicated region
    $region26: #{tpu_custom_call.1} parent=1 // pred_check
      _
    $region27: #{tpu_custom_call.1} parent=1 // pred_check_branch
      %150 = sbr.rel (0) target = $region29
    $region28: #{tpu_custom_call.1} parent=1 // pred_region
      %151 = dma.done [#allocation4], 128
    $region29: #{tpu_custom_call.1} parent=1 // pred_fallthru
      _
    %152 = vsyncpa [#allocation3], 1
    %153 = vsyncpa [#allocation6], 1
    %154 = vsyncpa [#allocation4], 1

</llo_original>
